<compile_context>
chip_gen: v7x
topology: tpu7x:2x2x1
jax: 0.10.0
libtpu: 0.0.40
codegen_flags: <defaults>
</compile_context>

<pallas_src>
import functools
import math

import numpy as np

import jax
import jax.numpy as jnp
from jax import lax
from jax.experimental import pallas as pl
from jax.experimental.pallas import tpu as pltpu

_LANES = 128


def _dot01(a, s01):
    """dot(a_f32, s01) with a {0,1} selector, exact to ~2**-16 of |a|.

    `a` is split into bf16 hi/lo pieces (each exactly bf16-representable), so
    two native single-pass bf16 MXU matmuls with f32 accumulation recover the
    f32 result -- no Precision.HIGHEST multi-pass emulation, so the MXU never
    becomes the saturating unit for this memory-bound kernel.
    """
    hi = a.astype(jnp.bfloat16)
    lo = (a - hi.astype(jnp.float32)).astype(jnp.bfloat16)
    return (jnp.dot(hi, s01, preferred_element_type=jnp.float32)
            + jnp.dot(lo, s01, preferred_element_type=jnp.float32))


def _layernorm_kernel(x_ref, g_ref, b_ref, o_ref, *, eps, hidden):
    """fold == 1: one LayerNorm segment per (lane-dense) row."""
    x = x_ref[...].astype(jnp.float32)                      # (R, hidden)
    inv_h = jnp.float32(1.0 / hidden)
    mean = jnp.sum(x, axis=-1, keepdims=True) * inv_h       # XLU lane reduce
    xc = x - mean
    var = jnp.sum(xc * xc, axis=-1, keepdims=True) * inv_h  # two-pass (stable)
    inv = lax.rsqrt(var + eps)                              # EUP
    y = xc * inv * g_ref[...] + b_ref[...]
    o_ref[...] = y.astype(o_ref.dtype)


def _layernorm_fold_kernel(x_ref, g_ref, b_ref, sel_ref, selt_ref, o_ref, *,
                           eps, hidden):
    """fold > 1: `fold = 128 // hidden` logical rows packed per 128-lane row.

    x_ref   : (ROW_TILE, fold*hidden)  lane-dense tile
    g_ref/b_ref : (1, fold*hidden)     gamma/beta tiled `fold` times, f32
    sel_ref : (fold*hidden, fold)      {0,1} segment selector, bf16
    selt_ref: (fold, fold*hidden)      transposed selector (broadcast back)
    """
    x = x_ref[...].astype(jnp.float32)                      # (R, W)
    sel = sel_ref[...]
    selt = selt_ref[...]
    inv_h = jnp.float32(1.0 / hidden)

    mean = _dot01(x, sel) * inv_h                           # (R, fold)
    mean_b = _dot01(mean, selt)                             # (R, W) broadcast
    xc = x - mean_b
    var = _dot01(xc * xc, sel) * inv_h                      # two-pass variance
    inv = lax.rsqrt(var + eps)                              # EUP, (R, fold)
    inv_b = _dot01(inv, selt)                               # (R, W) broadcast
    y = xc * inv_b * g_ref[...] + b_ref[...]
    o_ref[...] = y.astype(o_ref.dtype)


def _choose_row_tile(frows, width, itemsize):
    """VMEM-budget-driven row tile for the folded (frows, width) array."""
    # Sublane packing: 8 rows/vreg for f32, 16 for bf16, 32 for int8/fp8.
    sub = max(8, 32 // itemsize)
    if frows <= 2 * sub:
        return frows                         # one block covering all rows

    # Conservative budget that fits every generation (v7x: 64 MiB physical,
    # default scoped limits are 16 MiB v5e / 32 MiB v6e+v7x -- we raise the
    # limit explicitly via vmem_limit_bytes below).
    vmem_budget = 40 * 1024 * 1024
    # Double-buffered input + output blocks plus ~8 f32 full-tile temporaries.
    bytes_per_row = width * (2 * itemsize + 2 * itemsize + 8 * 4)
    budget_tile = max(sub, (vmem_budget // bytes_per_row) // sub * sub)

    # 512-1024-row tiles amortize the ~0.35us per-step overhead; >=4 steps for
    # large inputs keeps prefetch/compute/writeback overlapped; an even step
    # count keeps both v7x TensorCores busy under the "parallel" grid axis.
    target_tile = min(1024, budget_tile)
    steps = max(2, pl.cdiv(frows, target_tile))
    if frows >= 2048:
        steps = max(steps, 4)
    if steps % 2:
        steps += 1
    row_tile = min(budget_tile, pl.cdiv(pl.cdiv(frows, steps), sub) * sub)
    return max(sub, row_tile)


def layernorm_pallas(x, gamma, beta, *, eps=1e-5):
    """LayerNorm over the last dim of x (any leading dims), elementwise affine."""
    orig_shape = x.shape
    hidden = orig_shape[-1]
    rows = math.prod(orig_shape[:-1]) if len(orig_shape) > 1 else 1
    in_dtype = x.dtype
    itemsize = jnp.dtype(in_dtype).itemsize

    # Lane folding so HBM<->VMEM tiles and stores are full-width (lane-dense).
    if hidden < _LANES and _LANES % hidden == 0:
        fold = _LANES // hidden
        pad_rows = (-rows) % fold            # pad a handful of rows rather than
    else:                                    # losing lane density everywhere
        fold = 1
        pad_rows = 0
        # TODO(synk): hidden < 128 with 128 % hidden != 0 still runs lane-sparse
        # (width < 128); a masked-lane selector variant could recover density.
    width = fold * hidden

    x2 = x.reshape(rows, hidden)
    if pad_rows:
        x2 = jnp.concatenate(
            [x2, jnp.zeros((pad_rows, hidden), in_dtype)], axis=0)
    prows = rows + pad_rows
    frows = prows // fold
    x2 = x2.reshape(frows, width)

    g2 = jnp.tile(gamma.astype(jnp.float32).reshape(1, hidden), (1, fold))
    b2 = jnp.tile(beta.astype(jnp.float32).reshape(1, hidden), (1, fold))

    row_tile = _choose_row_tile(frows, width, itemsize)
    grid = (pl.cdiv(frows, row_tile),)

    cost = pl.CostEstimate(
        flops=10 * rows * hidden,
        transcendentals=rows,
        bytes_accessed=2 * rows * hidden * itemsize + 2 * width * 4,
    )
    cparams = pltpu.CompilerParams(
        dimension_semantics=("parallel",),
        # Above the 16 MiB (v5e) / 32 MiB (v6e, v7x) scoped defaults, below
        # v7x's 64 MiB physical VMEM; block sizing above targets ~40 MiB.
        vmem_limit_bytes=48 * 1024 * 1024,
    )

    x_spec = pl.BlockSpec((row_tile, width), lambda i: (i, 0))
    vec_spec = pl.BlockSpec((1, width), lambda i: (0, 0))
    out_spec = pl.BlockSpec((row_tile, width), lambda i: (i, 0))
    out_shape = jax.ShapeDtypeStruct((frows, width), in_dtype)

    if fold == 1:
        out = pl.pallas_call(
            functools.partial(_layernorm_kernel, eps=eps, hidden=hidden),
            out_shape=out_shape,
            grid=grid,
            in_specs=[x_spec, vec_spec, vec_spec],
            out_specs=out_spec,
            compiler_params=cparams,
            cost_estimate=cost,
        )(x2, g2, b2)
    else:
        # {0,1} segment selectors: built once host-side (hoisted out of the
        # per-grid-step body -- JAX does not CSE broadcast_in_dim) and passed
        # as tiny constant-index inputs.  0/1 is exact in bf16.
        lane = np.arange(width)[:, None]
        seg = np.arange(fold)[None, :]
        sel_np = (lane // hidden == seg).astype(np.float32)     # (W, fold)
        sel = jnp.asarray(sel_np, dtype=jnp.bfloat16)
        selt = jnp.asarray(sel_np.T, dtype=jnp.bfloat16)        # (fold, W)
        out = pl.pallas_call(
            functools.partial(_layernorm_fold_kernel, eps=eps, hidden=hidden),
            out_shape=out_shape,
            grid=grid,
            in_specs=[x_spec, vec_spec, vec_spec,
                      pl.BlockSpec((width, fold), lambda i: (0, 0)),
                      pl.BlockSpec((fold, width), lambda i: (0, 0))],
            out_specs=out_spec,
            compiler_params=cparams,
            cost_estimate=cost,
        )(x2, g2, b2, sel, selt)

    out = out.reshape(prows, hidden)
    if pad_rows:
        out = out[:rows]
    return out.reshape(orig_shape)


if __name__ == "__main__":
    # ModelDirect(operator=torch.nn.LayerNorm, kwargs={"normalized_shape": (32,)})
    batch, seq, hidden = 2, 8, 32
    eps = 1e-5

    key = jax.random.PRNGKey(0)
    x = jax.random.normal(key, (batch, seq, hidden), dtype=jnp.float32)

    # Deterministic affine parameters (torch default is ones/zeros; vary them
    # slightly to exercise the affine path).
    gamma = 1.0 + 0.01 * jnp.arange(hidden, dtype=jnp.float32)
    beta = 0.1 * jnp.arange(hidden, dtype=jnp.float32) / hidden

    y = layernorm_pallas(x, gamma, beta, eps=eps)
    y = jax.block_until_ready(y)

    # Pure-JAX reference (torch LayerNorm: biased variance, eps inside sqrt).
    mean = jnp.mean(x, axis=-1, keepdims=True)
    var = jnp.mean((x - mean) ** 2, axis=-1, keepdims=True)
    y_ref = (x - mean) / jnp.sqrt(var + eps) * gamma + beta
    assert jnp.allclose(y, y_ref, atol=1e-5, rtol=1e-4), "mismatch vs reference"

    print("KERNEL_OK")
</pallas_src>

<mosaic_0001>
module attributes {stable_mosaic.version = 11 : i64} {
  func.func @_layernorm_fold_kernel(%arg0: i32, %arg1: memref<4x128xf32, #tpu.memory_space<vmem>>, %arg2: memref<1x128xf32, #tpu.memory_space<vmem>>, %arg3: memref<1x128xf32, #tpu.memory_space<vmem>>, %arg4: memref<128x4xbf16, #tpu.memory_space<vmem>>, %arg5: memref<4x128xbf16, #tpu.memory_space<vmem>>, %arg6: memref<4x128xf32, #tpu.memory_space<vmem>>) attributes {dimension_semantics = [#tpu.dimension_semantics<parallel>], iteration_bounds = array<i64: 1>, scalar_prefetch = 0 : i64, scratch_operands = 0 : i64, tpu.core_type = #tpu.core_type<tc>, window_params = [{transform_indices = @transform_0, window_bounds = array<i64: 4, 128>}, {pipeline_mode = #tpu.pipeline_mode<synchronous>, transform_indices = @transform_1, window_bounds = array<i64: 1, 128>}, {pipeline_mode = #tpu.pipeline_mode<synchronous>, transform_indices = @transform_2, window_bounds = array<i64: 1, 128>}, {pipeline_mode = #tpu.pipeline_mode<synchronous>, transform_indices = @transform_3, window_bounds = array<i64: 128, 4>}, {pipeline_mode = #tpu.pipeline_mode<synchronous>, transform_indices = @transform_4, window_bounds = array<i64: 4, 128>}, {transform_indices = @transform_5, window_bounds = array<i64: 4, 128>}]} {
    %c0 = arith.constant 0 : index
    %c0_0 = arith.constant 0 : index
    %0 = vector.load %arg1[%c0, %c0_0] : memref<4x128xf32, #tpu.memory_space<vmem>>, vector<4x128xf32>
    %c0_1 = arith.constant 0 : index
    %c0_2 = arith.constant 0 : index
    %1 = vector.load %arg4[%c0_1, %c0_2] : memref<128x4xbf16, #tpu.memory_space<vmem>>, vector<128x4xbf16>
    %c0_3 = arith.constant 0 : index
    %c0_4 = arith.constant 0 : index
    %2 = vector.load %arg5[%c0_3, %c0_4] : memref<4x128xbf16, #tpu.memory_space<vmem>>, vector<4x128xbf16>
    %3 = arith.truncf %0 : vector<4x128xf32> to vector<4x128xbf16>
    %4 = arith.extf %3 : vector<4x128xbf16> to vector<4x128xf32>
    %5 = arith.subf %0, %4 : vector<4x128xf32>
    %6 = arith.truncf %5 : vector<4x128xf32> to vector<4x128xbf16>
    %cst = arith.constant dense<0.000000e+00> : vector<4x4xf32>
    %7 = tpu.matmul %3, %1, %cst {dimension_numbers = #tpu.dot_dimension_numbers<[1], [0], [0], [1], [0, 0, 1, 1], [], []>} : vector<4x128xbf16>, vector<128x4xbf16>, vector<4x4xf32> -> vector<4x4xf32>
    %cst_5 = arith.constant dense<0.000000e+00> : vector<4x4xf32>
    %8 = tpu.matmul %6, %1, %cst_5 {dimension_numbers = #tpu.dot_dimension_numbers<[1], [0], [0], [1], [0, 0, 1, 1], [], []>} : vector<4x128xbf16>, vector<128x4xbf16>, vector<4x4xf32> -> vector<4x4xf32>
    %9 = arith.addf %7, %8 : vector<4x4xf32>
    %cst_6 = arith.constant 3.125000e-02 : f32
    %10 = vector.broadcast %cst_6 : f32 to vector<4x4xf32>
    %11 = arith.mulf %9, %10 : vector<4x4xf32>
    %12 = arith.truncf %11 : vector<4x4xf32> to vector<4x4xbf16>
    %13 = arith.extf %12 : vector<4x4xbf16> to vector<4x4xf32>
    %14 = arith.subf %11, %13 : vector<4x4xf32>
    %15 = arith.truncf %14 : vector<4x4xf32> to vector<4x4xbf16>
    %cst_7 = arith.constant dense<0.000000e+00> : vector<4x128xf32>
    %16 = tpu.matmul %12, %2, %cst_7 {dimension_numbers = #tpu.dot_dimension_numbers<[1], [0], [0], [1], [0, 0, 1, 1], [], []>} : vector<4x4xbf16>, vector<4x128xbf16>, vector<4x128xf32> -> vector<4x128xf32>
    %cst_8 = arith.constant dense<0.000000e+00> : vector<4x128xf32>
    %17 = tpu.matmul %15, %2, %cst_8 {dimension_numbers = #tpu.dot_dimension_numbers<[1], [0], [0], [1], [0, 0, 1, 1], [], []>} : vector<4x4xbf16>, vector<4x128xbf16>, vector<4x128xf32> -> vector<4x128xf32>
    %18 = arith.addf %16, %17 : vector<4x128xf32>
    %19 = arith.subf %0, %18 : vector<4x128xf32>
    %20 = arith.mulf %19, %19 : vector<4x128xf32>
    %21 = arith.truncf %20 : vector<4x128xf32> to vector<4x128xbf16>
    %22 = arith.extf %21 : vector<4x128xbf16> to vector<4x128xf32>
    %23 = arith.subf %20, %22 : vector<4x128xf32>
    %24 = arith.truncf %23 : vector<4x128xf32> to vector<4x128xbf16>
    %cst_9 = arith.constant dense<0.000000e+00> : vector<4x4xf32>
    %25 = tpu.matmul %21, %1, %cst_9 {dimension_numbers = #tpu.dot_dimension_numbers<[1], [0], [0], [1], [0, 0, 1, 1], [], []>} : vector<4x128xbf16>, vector<128x4xbf16>, vector<4x4xf32> -> vector<4x4xf32>
    %cst_10 = arith.constant dense<0.000000e+00> : vector<4x4xf32>
    %26 = tpu.matmul %24, %1, %cst_10 {dimension_numbers = #tpu.dot_dimension_numbers<[1], [0], [0], [1], [0, 0, 1, 1], [], []>} : vector<4x128xbf16>, vector<128x4xbf16>, vector<4x4xf32> -> vector<4x4xf32>
    %27 = arith.addf %25, %26 : vector<4x4xf32>
    %cst_11 = arith.constant 3.125000e-02 : f32
    %28 = vector.broadcast %cst_11 : f32 to vector<4x4xf32>
    %29 = arith.mulf %27, %28 : vector<4x4xf32>
    %cst_12 = arith.constant 9.99999974E-6 : f32
    %30 = vector.broadcast %cst_12 : f32 to vector<4x4xf32>
    %31 = arith.addf %29, %30 : vector<4x4xf32>
    %32 = math.rsqrt %31 : vector<4x4xf32>
    %33 = arith.truncf %32 : vector<4x4xf32> to vector<4x4xbf16>
    %34 = arith.extf %33 : vector<4x4xbf16> to vector<4x4xf32>
    %35 = arith.subf %32, %34 : vector<4x4xf32>
    %36 = arith.truncf %35 : vector<4x4xf32> to vector<4x4xbf16>
    %cst_13 = arith.constant dense<0.000000e+00> : vector<4x128xf32>
    %37 = tpu.matmul %33, %2, %cst_13 {dimension_numbers = #tpu.dot_dimension_numbers<[1], [0], [0], [1], [0, 0, 1, 1], [], []>} : vector<4x4xbf16>, vector<4x128xbf16>, vector<4x128xf32> -> vector<4x128xf32>
    %cst_14 = arith.constant dense<0.000000e+00> : vector<4x128xf32>
    %38 = tpu.matmul %36, %2, %cst_14 {dimension_numbers = #tpu.dot_dimension_numbers<[1], [0], [0], [1], [0, 0, 1, 1], [], []>} : vector<4x4xbf16>, vector<4x128xbf16>, vector<4x128xf32> -> vector<4x128xf32>
    %39 = arith.addf %37, %38 : vector<4x128xf32>
    %40 = arith.mulf %19, %39 : vector<4x128xf32>
    %c0_15 = arith.constant 0 : index
    %c0_16 = arith.constant 0 : index
    %41 = vector.load %arg2[%c0_15, %c0_16] : memref<1x128xf32, #tpu.memory_space<vmem>>, vector<1x128xf32>
    %42 = vector.broadcast %41 : vector<1x128xf32> to vector<4x128xf32>
    %43 = arith.mulf %40, %42 : vector<4x128xf32>
    %c0_17 = arith.constant 0 : index
    %c0_18 = arith.constant 0 : index
    %44 = vector.load %arg3[%c0_17, %c0_18] : memref<1x128xf32, #tpu.memory_space<vmem>>, vector<1x128xf32>
    %45 = vector.broadcast %44 : vector<1x128xf32> to vector<4x128xf32>
    %46 = arith.addf %43, %45 : vector<4x128xf32>
    %c0_19 = arith.constant 0 : index
    %c0_20 = arith.constant 0 : index
    %47 = vector.load %arg6[%c0_19, %c0_20] : memref<4x128xf32, #tpu.memory_space<vmem>>, vector<4x128xf32>
    tpu.vector_store %arg6[%c0_19, %c0_20], %46 {strides = array<i32>} : memref<4x128xf32, #tpu.memory_space<vmem>>, vector<4x128xf32>,
    return
  }
  func.func @transform_0(%arg0: i32) -> (i32, i32) {
    %c0_i32 = arith.constant 0 : i32
    %c0_i32_0 = arith.constant 0 : i32
    return %arg0, %c0_i32 : i32, i32
  }
  func.func @transform_1(%arg0: i32) -> (i32, i32) {
    %c0_i32 = arith.constant 0 : i32
    %c0_i32_0 = arith.constant 0 : i32
    %c0_i32_1 = arith.constant 0 : i32
    return %c0_i32, %c0_i32_0 : i32, i32
  }
  func.func @transform_2(%arg0: i32) -> (i32, i32) {
    %c0_i32 = arith.constant 0 : i32
    %c0_i32_0 = arith.constant 0 : i32
    %c0_i32_1 = arith.constant 0 : i32
    return %c0_i32, %c0_i32_0 : i32, i32
  }
  func.func @transform_3(%arg0: i32) -> (i32, i32) {
    %c0_i32 = arith.constant 0 : i32
    %c0_i32_0 = arith.constant 0 : i32
    %c0_i32_1 = arith.constant 0 : i32
    return %c0_i32, %c0_i32_0 : i32, i32
  }
  func.func @transform_4(%arg0: i32) -> (i32, i32) {
    %c0_i32 = arith.constant 0 : i32
    %c0_i32_0 = arith.constant 0 : i32
    %c0_i32_1 = arith.constant 0 : i32
    return %c0_i32, %c0_i32_0 : i32, i32
  }
  func.func @transform_5(%arg0: i32) -> (i32, i32) {
    %c0_i32 = arith.constant 0 : i32
    %c0_i32_0 = arith.constant 0 : i32
    return %arg0, %c0_i32 : i32, i32
  }
}

</mosaic_0001>

<llo_original>
// kernel: tpu_custom_call.1
$region0: #{tpu_custom_call.1}
  #allocation0 [shape = 'u32[]', space=smem, size = 0x4, offset = 0x4, fixed_abs, tag = 'smem constant byte address 0x4 - core index']
  #allocation1 [shape = 'u32[144,128]{1,0:T(1,128)}', space=vmem, size = 0x12000, scoped, tag = 'internal scratch']
  %s0 = inlined_call_operand.vmem [shape: f32[4,128], index: 0, kind: input, shape index: {}]
  %s1 = inlined_call_operand.vmem [shape: f32[1,128], index: 1, kind: input, shape index: {}]
  %s2 = inlined_call_operand.vmem [shape: f32[1,128], index: 2, kind: input, shape index: {}]
  %s3 = inlined_call_operand.vmem [shape: bf16[128,4], index: 3, kind: input, shape index: {}]
  %s4 = inlined_call_operand.vmem [shape: bf16[4,128], index: 4, kind: input, shape index: {}]
  %s5 = inlined_call_operand.hbm [shape: f32[4,128], index: 5, kind: output, shape index: {}]
  %s6 = sld [smem:[#allocation0]]
  $region30: #{tpu_custom_call.1} parent=0
    _
  %s8 = ssub.s32 1, %s6
  %s9 = scalar_select 0, %s8, %s6
  $region1: #{tpu_custom_call.1} parent=0
    #allocation2 [shape = 'u8[2048]{0}', space=vmem, size = 0x800, scoped, tag = 'output window, operand 0, single buffered']
    #allocation3 [shape = 's32[1]{0}', space=sflag, size = 0x4, scoped, tag = 'scoped memory for tpu_custom_call.1']
    %10 = vsyncpa [#allocation3], 0
    // Predicated region
    $region2: #{tpu_custom_call.1} parent=1 // pred_check
      _
    $region3: #{tpu_custom_call.1} parent=1 // pred_check_branch
      %12 = sbr.rel (0) target = $region5
    $region4: #{tpu_custom_call.1} parent=1 // pred_region
      _
    $region5: #{tpu_custom_call.1} parent=1 // pred_fallthru
      _
    // Predicated region
    $region6: #{tpu_custom_call.1} parent=1 // pred_check
      _
    $region7: #{tpu_custom_call.1} parent=1 // pred_check_branch
      %14 = sbr.rel (0) target = $region9
    $region8: #{tpu_custom_call.1} parent=1 // pred_region
      _
    $region9: #{tpu_custom_call.1} parent=1 // pred_fallthru
      _
    // Predicated region
    $region10: #{tpu_custom_call.1} parent=1 // pred_check
      _
    $region11: #{tpu_custom_call.1} parent=1 // pred_check_branch
      %16 = sbr.rel (0) target = $region13
    $region12: #{tpu_custom_call.1} parent=1 // pred_region
      _
    $region13: #{tpu_custom_call.1} parent=1 // pred_fallthru
      _
    // Predicated region
    $region14: #{tpu_custom_call.1} parent=1 // pred_check
      _
    $region15: #{tpu_custom_call.1} parent=1 // pred_check_branch
      %18 = sbr.rel (0) target = $region17
    $region16: #{tpu_custom_call.1} parent=1 // pred_region
      _
    $region17: #{tpu_custom_call.1} parent=1 // pred_fallthru
      _
    // Predicated region
    $region18: #{tpu_custom_call.1} parent=1 // pred_check
      _
    $region19: #{tpu_custom_call.1} parent=1 // pred_check_branch
      %20 = sbr.rel (0) target = $region21
    $region20: #{tpu_custom_call.1} parent=1 // pred_region
      _
    $region21: #{tpu_custom_call.1} parent=1 // pred_fallthru
      _
    %v22 = vld [vmem:[%s0] sm:$0xf]
    %v23 = vld [vmem:[%s3] sm:$0xf]
    %v24 = vld [vmem:[%s3 + $0x4] sm:$0xf]
    %v25 = vld [vmem:[%s3 + $0x8] sm:$0xf]
    %v26 = vld [vmem:[%s3 + $0xc] sm:$0xf]
    %v27 = vld [vmem:[%s3 + $0x10] sm:$0xf]
    %v28 = vld [vmem:[%s3 + $0x14] sm:$0xf]
    %v29 = vld [vmem:[%s3 + $0x18] sm:$0xf]
    %v30 = vld [vmem:[%s3 + $0x1c] sm:$0xf]
    %v31 = vld [vmem:[%s3 + $0x20] sm:$0xf]
    %v32 = vld [vmem:[%s3 + $0x24] sm:$0xf]
    %v33 = vld [vmem:[%s3 + $0x28] sm:$0xf]
    %v34 = vld [vmem:[%s3 + $0x2c] sm:$0xf]
    %v35 = vld [vmem:[%s3 + $0x30] sm:$0xf]
    %v36 = vld [vmem:[%s3 + $0x34] sm:$0xf]
    %v37 = vld [vmem:[%s3 + $0x38] sm:$0xf]
    %v38 = vld [vmem:[%s3 + $0x3c] sm:$0xf]
    %v39 = vld [vmem:[%s4] sm:$0x3]
    %v40 = vpack.c.bf16 %v22, %v22
    %v41 = vunpack.c.l.bf16 %v40
    %v42 = vsub.f32 %v22, %v41
    %v43 = vpack.c.bf16 %v42, %v42
    %v60 = vunpack.c.l.b16 %v23
    %v61 = vunpack.c.l.b16 %v24
    %v62 = vunpack.c.l.b16 %v25
    %v63 = vunpack.c.l.b16 %v26
    %v64 = vunpack.c.l.b16 %v27
    %v65 = vunpack.c.l.b16 %v28
    %v66 = vunpack.c.l.b16 %v29
    %v67 = vunpack.c.l.b16 %v30
    %v68 = vunpack.c.l.b16 %v31
    %v69 = vunpack.c.l.b16 %v32
    %v70 = vunpack.c.l.b16 %v33
    %v71 = vunpack.c.l.b16 %v34
    %v72 = vunpack.c.l.b16 %v35
    %v73 = vunpack.c.l.b16 %v36
    %v74 = vunpack.c.l.b16 %v37
    %v75 = vunpack.c.l.b16 %v38
    %v76 = vpack.c.b16 %v61, %v60
    %v77 = vpack.c.b16 %v63, %v62
    %v78 = vpack.c.b16 %v65, %v64
    %v79 = vpack.c.b16 %v67, %v66
    %v80 = vpack.c.b16 %v69, %v68
    %v81 = vpack.c.b16 %v71, %v70
    %v82 = vpack.c.b16 %v73, %v72
    %v83 = vpack.c.b16 %v75, %v74
    %92 = vmatprep.subr.bf16.mxu0 0
    %93 = vmatpush1.bf16.msra.mxu0 %v76
    %94 = vmatprep.subr.bf16.mxu0 0
    %95 = vmatpush1.bf16.msra.mxu0 %v77
    %96 = vmatprep.subr.bf16.mxu0 0
    %97 = vmatpush1.bf16.msra.mxu0 %v78
    %98 = vmatprep.subr.bf16.mxu0 0
    %99 = vmatpush1.bf16.msra.mxu0 %v79
    %100 = vmatprep.subr.bf16.mxu0 0
    %101 = vmatpush1.bf16.msra.mxu0 %v80
    %102 = vmatprep.subr.bf16.mxu0 0
    %103 = vmatpush1.bf16.msra.mxu0 %v81
    %104 = vmatprep.subr.bf16.mxu0 0
    %105 = vmatpush1.bf16.msra.mxu0 %v82
    %106 = vmatprep.subr.bf16.mxu0 0
    %107 = vmatpush1.bf16.msra.mxu0 %v83
    %108 = vmatprep.subr.bf16.mxu0 0
    %109 = vmatpush1.bf16.msra.mxu0 0
    %110 = vmatprep.subr.bf16.mxu0 0
    %111 = vmatpush1.bf16.msra.mxu0 0
    %112 = vmatprep.subr.bf16.mxu0 0
    %113 = vmatpush1.bf16.msra.mxu0 0
    %114 = vmatprep.subr.bf16.mxu0 0
    %115 = vmatpush1.bf16.msra.mxu0 0
    %116 = vmatprep.subr.bf16.mxu0 0
    %117 = vmatpush1.bf16.msra.mxu0 0
    %118 = vmatprep.subr.bf16.mxu0 0
    %119 = vmatpush1.bf16.msra.mxu0 0
    %120 = vmatprep.subr.bf16.mxu0 0
    %121 = vmatpush1.bf16.msra.mxu0 0
    %122 = vmatprep.subr.bf16.mxu0 0
    %123 = vmatpush1.bf16.msra.mxu0 0
    %124 = vmatprep.mubr.bf16.mxu0 0
    %125 = vmatmul.mubr.bf16.gmra.mrb[0].mxu0 %v43
    %v126 = vpop.f32.mrb[0].mxu0
    %v127 = vadd.f32 0.0, %v126
    %v128 = vpop.f32.mrb[0].mxu0
    %v129 = vpop.f32.mrb[0].mxu0
    %v130 = vpop.f32.mrb[0].mxu0
    %131 = vdwg.mxu0
    %132 = vmatprep.subr.bf16.mxu0 0
    %133 = vmatpush1.bf16.msra.mxu0 %v76
    %134 = vmatprep.subr.bf16.mxu0 0
    %135 = vmatpush1.bf16.msra.mxu0 %v77
    %136 = vmatprep.subr.bf16.mxu0 0
    %137 = vmatpush1.bf16.msra.mxu0 %v78
    %138 = vmatprep.subr.bf16.mxu0 0
    %139 = vmatpush1.bf16.msra.mxu0 %v79
    %140 = vmatprep.subr.bf16.mxu0 0
    %141 = vmatpush1.bf16.msra.mxu0 %v80
    %142 = vmatprep.subr.bf16.mxu0 0
    %143 = vmatpush1.bf16.msra.mxu0 %v81
    %144 = vmatprep.subr.bf16.mxu0 0
    %145 = vmatpush1.bf16.msra.mxu0 %v82
    %146 = vmatprep.subr.bf16.mxu0 0
    %147 = vmatpush1.bf16.msra.mxu0 %v83
    %148 = vmatprep.subr.bf16.mxu0 0
    %149 = vmatpush1.bf16.msra.mxu0 0
    %150 = vmatprep.subr.bf16.mxu0 0
    %151 = vmatpush1.bf16.msra.mxu0 0
    %152 = vmatprep.subr.bf16.mxu0 0
    %153 = vmatpush1.bf16.msra.mxu0 0
    %154 = vmatprep.subr.bf16.mxu0 0
    %155 = vmatpush1.bf16.msra.mxu0 0
    %156 = vmatprep.subr.bf16.mxu0 0
    %157 = vmatpush1.bf16.msra.mxu0 0
    %158 = vmatprep.subr.bf16.mxu0 0
    %159 = vmatpush1.bf16.msra.mxu0 0
    %160 = vmatprep.subr.bf16.mxu0 0
    %161 = vmatpush1.bf16.msra.mxu0 0
    %162 = vmatprep.subr.bf16.mxu0 0
    %163 = vmatpush1.bf16.msra.mxu0 0
    %164 = vmatprep.mubr.bf16.mxu0 0
    %165 = vmatmul.mubr.bf16.gmra.mrb[0].mxu0 %v40
    %v166 = vpop.f32.mrb[0].mxu0
    %v167 = vadd.f32 %v127, %v166
    %v168 = vpop.f32.mrb[0].mxu0
    %v169 = vpop.f32.mrb[0].mxu0
    %v170 = vpop.f32.mrb[0].mxu0
    %171 = vdwg.mxu0
    %v172 = vmul.f32 %v167, 0.03125
    %v173 = vpack.c.bf16 %v172, %v172
    %v174 = vunpack.c.l.bf16 %v173
    %v175 = vsub.f32 %v172, %v174
    %v176 = vpack.c.bf16 %v175, %v175
    %vm177 = vcmask 31744
    %v179 = vsel %vm177, %v176, 0
    %vm181 = vcmask 1041408
    %v183 = vsel %vm181, %v39, 0
    %185 = vmatprep.subr.bf16.mxu0 0
    %186 = vmatpush1.bf16.msra.mxu0 %v183
    %187 = vmatprep.subr.bf16.mxu0 0
    %188 = vmatpush1.bf16.msra.mxu0 0
    %189 = vmatprep.subr.bf16.mxu0 0
    %190 = vmatpush1.bf16.msra.mxu0 0
    %191 = vmatprep.subr.bf16.mxu0 0
    %192 = vmatpush1.bf16.msra.mxu0 0
    %193 = vmatprep.subr.bf16.mxu0 0
    %194 = vmatpush1.bf16.msra.mxu0 0
    %195 = vmatprep.subr.bf16.mxu0 0
    %196 = vmatpush1.bf16.msra.mxu0 0
    %197 = vmatprep.subr.bf16.mxu0 0
    %198 = vmatpush1.bf16.msra.mxu0 0
    %199 = vmatprep.subr.bf16.mxu0 0
    %200 = vmatpush1.bf16.msra.mxu0 0
    %201 = vmatprep.subr.bf16.mxu0 0
    %202 = vmatpush1.bf16.msra.mxu0 0
    %203 = vmatprep.subr.bf16.mxu0 0
    %204 = vmatpush1.bf16.msra.mxu0 0
    %205 = vmatprep.subr.bf16.mxu0 0
    %206 = vmatpush1.bf16.msra.mxu0 0
    %207 = vmatprep.subr.bf16.mxu0 0
    %208 = vmatpush1.bf16.msra.mxu0 0
    %209 = vmatprep.subr.bf16.mxu0 0
    %210 = vmatpush1.bf16.msra.mxu0 0
    %211 = vmatprep.subr.bf16.mxu0 0
    %212 = vmatpush1.bf16.msra.mxu0 0
    %213 = vmatprep.subr.bf16.mxu0 0
    %214 = vmatpush1.bf16.msra.mxu0 0
    %215 = vmatprep.subr.bf16.mxu0 0
    %216 = vmatpush1.bf16.msra.mxu0 0
    %217 = vmatprep.mubr.bf16.mxu0 0
    %218 = vmatmul.mubr.bf16.gmra.mrb[0].mxu0 %v179
    %v219 = vpop.f32.mrb[0].mxu0
    %v220 = vadd.f32 0.0, %v219
    %v221 = vpop.f32.mrb[0].mxu0
    %v222 = vpop.f32.mrb[0].mxu0
    %v223 = vpop.f32.mrb[0].mxu0
    %224 = vdwg.mxu0
    %v226 = vsel %vm177, %v173, 0
    %228 = vmatprep.subr.bf16.mxu0 0
    %229 = vmatpush1.bf16.msra.mxu0 %v183
    %230 = vmatprep.subr.bf16.mxu0 0
    %231 = vmatpush1.bf16.msra.mxu0 0
    %232 = vmatprep.subr.bf16.mxu0 0
    %233 = vmatpush1.bf16.msra.mxu0 0
    %234 = vmatprep.subr.bf16.mxu0 0
    %235 = vmatpush1.bf16.msra.mxu0 0
    %236 = vmatprep.subr.bf16.mxu0 0
    %237 = vmatpush1.bf16.msra.mxu0 0
    %238 = vmatprep.subr.bf16.mxu0 0
    %239 = vmatpush1.bf16.msra.mxu0 0
    %240 = vmatprep.subr.bf16.mxu0 0
    %241 = vmatpush1.bf16.msra.mxu0 0
    %242 = vmatprep.subr.bf16.mxu0 0
    %243 = vmatpush1.bf16.msra.mxu0 0
    %244 = vmatprep.subr.bf16.mxu0 0
    %245 = vmatpush1.bf16.msra.mxu0 0
    %246 = vmatprep.subr.bf16.mxu0 0
    %247 = vmatpush1.bf16.msra.mxu0 0
    %248 = vmatprep.subr.bf16.mxu0 0
    %249 = vmatpush1.bf16.msra.mxu0 0
    %250 = vmatprep.subr.bf16.mxu0 0
    %251 = vmatpush1.bf16.msra.mxu0 0
    %252 = vmatprep.subr.bf16.mxu0 0
    %253 = vmatpush1.bf16.msra.mxu0 0
    %254 = vmatprep.subr.bf16.mxu0 0
    %255 = vmatpush1.bf16.msra.mxu0 0
    %256 = vmatprep.subr.bf16.mxu0 0
    %257 = vmatpush1.bf16.msra.mxu0 0
    %258 = vmatprep.subr.bf16.mxu0 0
    %259 = vmatpush1.bf16.msra.mxu0 0
    %260 = vmatprep.mubr.bf16.mxu0 0
    %261 = vmatmul.mubr.bf16.gmra.mrb[0].mxu0 %v226
    %v262 = vpop.f32.mrb[0].mxu0
    %v263 = vadd.f32 %v220, %v262
    %v264 = vpop.f32.mrb[0].mxu0
    %v265 = vpop.f32.mrb[0].mxu0
    %v266 = vpop.f32.mrb[0].mxu0
    %267 = vdwg.mxu0
    %v268 = vsub.f32 %v22, %v263
    %v269 = vmul.f32 %v268, %v268
    %v270 = vpack.c.bf16 %v269, %v269
    %v271 = vunpack.c.l.bf16 %v270
    %v272 = vsub.f32 %v269, %v271
    %v273 = vpack.c.bf16 %v272, %v272
    %274 = vmatprep.subr.bf16.mxu0 0
    %275 = vmatpush1.bf16.msra.mxu0 %v76
    %276 = vmatprep.subr.bf16.mxu0 0
    %277 = vmatpush1.bf16.msra.mxu0 %v77
    %278 = vmatprep.subr.bf16.mxu0 0
    %279 = vmatpush1.bf16.msra.mxu0 %v78
    %280 = vmatprep.subr.bf16.mxu0 0
    %281 = vmatpush1.bf16.msra.mxu0 %v79
    %282 = vmatprep.subr.bf16.mxu0 0
    %283 = vmatpush1.bf16.msra.mxu0 %v80
    %284 = vmatprep.subr.bf16.mxu0 0
    %285 = vmatpush1.bf16.msra.mxu0 %v81
    %286 = vmatprep.subr.bf16.mxu0 0
    %287 = vmatpush1.bf16.msra.mxu0 %v82
    %288 = vmatprep.subr.bf16.mxu0 0
    %289 = vmatpush1.bf16.msra.mxu0 %v83
    %290 = vmatprep.subr.bf16.mxu0 0
    %291 = vmatpush1.bf16.msra.mxu0 0
    %292 = vmatprep.subr.bf16.mxu0 0
    %293 = vmatpush1.bf16.msra.mxu0 0
    %294 = vmatprep.subr.bf16.mxu0 0
    %295 = vmatpush1.bf16.msra.mxu0 0
    %296 = vmatprep.subr.bf16.mxu0 0
    %297 = vmatpush1.bf16.msra.mxu0 0
    %298 = vmatprep.subr.bf16.mxu0 0
    %299 = vmatpush1.bf16.msra.mxu0 0
    %300 = vmatprep.subr.bf16.mxu0 0
    %301 = vmatpush1.bf16.msra.mxu0 0
    %302 = vmatprep.subr.bf16.mxu0 0
    %303 = vmatpush1.bf16.msra.mxu0 0
    %304 = vmatprep.subr.bf16.mxu0 0
    %305 = vmatpush1.bf16.msra.mxu0 0
    %306 = vmatprep.mubr.bf16.mxu0 0
    %307 = vmatmul.mubr.bf16.gmra.mrb[0].mxu0 %v273
    %v308 = vpop.f32.mrb[0].mxu0
    %v309 = vadd.f32 0.0, %v308
    %v310 = vpop.f32.mrb[0].mxu0
    %v311 = vpop.f32.mrb[0].mxu0
    %v312 = vpop.f32.mrb[0].mxu0
    %313 = vdwg.mxu0
    %314 = vmatprep.subr.bf16.mxu0 0
    %315 = vmatpush1.bf16.msra.mxu0 %v76
    %316 = vmatprep.subr.bf16.mxu0 0
    %317 = vmatpush1.bf16.msra.mxu0 %v77
    %318 = vmatprep.subr.bf16.mxu0 0
    %319 = vmatpush1.bf16.msra.mxu0 %v78
    %320 = vmatprep.subr.bf16.mxu0 0
    %321 = vmatpush1.bf16.msra.mxu0 %v79
    %322 = vmatprep.subr.bf16.mxu0 0
    %323 = vmatpush1.bf16.msra.mxu0 %v80
    %324 = vmatprep.subr.bf16.mxu0 0
    %325 = vmatpush1.bf16.msra.mxu0 %v81
    %326 = vmatprep.subr.bf16.mxu0 0
    %327 = vmatpush1.bf16.msra.mxu0 %v82
    %328 = vmatprep.subr.bf16.mxu0 0
    %329 = vmatpush1.bf16.msra.mxu0 %v83
    %330 = vmatprep.subr.bf16.mxu0 0
    %331 = vmatpush1.bf16.msra.mxu0 0
    %332 = vmatprep.subr.bf16.mxu0 0
    %333 = vmatpush1.bf16.msra.mxu0 0
    %334 = vmatprep.subr.bf16.mxu0 0
    %335 = vmatpush1.bf16.msra.mxu0 0
    %336 = vmatprep.subr.bf16.mxu0 0
    %337 = vmatpush1.bf16.msra.mxu0 0
    %338 = vmatprep.subr.bf16.mxu0 0
    %339 = vmatpush1.bf16.msra.mxu0 0
    %340 = vmatprep.subr.bf16.mxu0 0
    %341 = vmatpush1.bf16.msra.mxu0 0
    %342 = vmatprep.subr.bf16.mxu0 0
    %343 = vmatpush1.bf16.msra.mxu0 0
    %344 = vmatprep.subr.bf16.mxu0 0
    %345 = vmatpush1.bf16.msra.mxu0 0
    %346 = vmatprep.mubr.bf16.mxu0 0
    %347 = vmatmul.mubr.bf16.gmra.mrb[0].mxu0 %v270
    %v348 = vpop.f32.mrb[0].mxu0
    %v349 = vadd.f32 %v309, %v348
    %v350 = vpop.f32.mrb[0].mxu0
    %v351 = vpop.f32.mrb[0].mxu0
    %v352 = vpop.f32.mrb[0].mxu0
    %353 = vdwg.mxu0
    %v354 = vmul.f32 %v349, 0.03125
    %v355 = vadd.f32 %v354, 1e-05
    %v356 = vrsqrt.pop %v355
    %v357 = vpack.c.bf16 %v356, %v356
    %v358 = vunpack.c.l.bf16 %v357
    %v359 = vsub.f32 %v356, %v358
    %v360 = vpack.c.bf16 %v359, %v359
    %v362 = vsel %vm177, %v360, 0
    %364 = vmatprep.subr.bf16.mxu0 0
    %365 = vmatpush1.bf16.msra.mxu0 %v183
    %366 = vmatprep.subr.bf16.mxu0 0
    %367 = vmatpush1.bf16.msra.mxu0 0
    %368 = vmatprep.subr.bf16.mxu0 0
    %369 = vmatpush1.bf16.msra.mxu0 0
    %370 = vmatprep.subr.bf16.mxu0 0
    %371 = vmatpush1.bf16.msra.mxu0 0
    %372 = vmatprep.subr.bf16.mxu0 0
    %373 = vmatpush1.bf16.msra.mxu0 0
    %374 = vmatprep.subr.bf16.mxu0 0
    %375 = vmatpush1.bf16.msra.mxu0 0
    %376 = vmatprep.subr.bf16.mxu0 0
    %377 = vmatpush1.bf16.msra.mxu0 0
    %378 = vmatprep.subr.bf16.mxu0 0
    %379 = vmatpush1.bf16.msra.mxu0 0
    %380 = vmatprep.subr.bf16.mxu0 0
    %381 = vmatpush1.bf16.msra.mxu0 0
    %382 = vmatprep.subr.bf16.mxu0 0
    %383 = vmatpush1.bf16.msra.mxu0 0
    %384 = vmatprep.subr.bf16.mxu0 0
    %385 = vmatpush1.bf16.msra.mxu0 0
    %386 = vmatprep.subr.bf16.mxu0 0
    %387 = vmatpush1.bf16.msra.mxu0 0
    %388 = vmatprep.subr.bf16.mxu0 0
    %389 = vmatpush1.bf16.msra.mxu0 0
    %390 = vmatprep.subr.bf16.mxu0 0
    %391 = vmatpush1.bf16.msra.mxu0 0
    %392 = vmatprep.subr.bf16.mxu0 0
    %393 = vmatpush1.bf16.msra.mxu0 0
    %394 = vmatprep.subr.bf16.mxu0 0
    %395 = vmatpush1.bf16.msra.mxu0 0
    %396 = vmatprep.mubr.bf16.mxu0 0
    %397 = vmatmul.mubr.bf16.gmra.mrb[0].mxu0 %v362
    %v398 = vpop.f32.mrb[0].mxu0
    %v399 = vadd.f32 0.0, %v398
    %v400 = vpop.f32.mrb[0].mxu0
    %v401 = vpop.f32.mrb[0].mxu0
    %v402 = vpop.f32.mrb[0].mxu0
    %403 = vdwg.mxu0
    %v405 = vsel %vm177, %v357, 0
    %407 = vmatprep.subr.bf16.mxu0 0
    %408 = vmatpush1.bf16.msra.mxu0 %v183
    %409 = vmatprep.subr.bf16.mxu0 0
    %410 = vmatpush1.bf16.msra.mxu0 0
    %411 = vmatprep.subr.bf16.mxu0 0
    %412 = vmatpush1.bf16.msra.mxu0 0
    %413 = vmatprep.subr.bf16.mxu0 0
    %414 = vmatpush1.bf16.msra.mxu0 0
    %415 = vmatprep.subr.bf16.mxu0 0
    %416 = vmatpush1.bf16.msra.mxu0 0
    %417 = vmatprep.subr.bf16.mxu0 0
    %418 = vmatpush1.bf16.msra.mxu0 0
    %419 = vmatprep.subr.bf16.mxu0 0
    %420 = vmatpush1.bf16.msra.mxu0 0
    %421 = vmatprep.subr.bf16.mxu0 0
    %422 = vmatpush1.bf16.msra.mxu0 0
    %423 = vmatprep.subr.bf16.mxu0 0
    %424 = vmatpush1.bf16.msra.mxu0 0
    %425 = vmatprep.subr.bf16.mxu0 0
    %426 = vmatpush1.bf16.msra.mxu0 0
    %427 = vmatprep.subr.bf16.mxu0 0
    %428 = vmatpush1.bf16.msra.mxu0 0
    %429 = vmatprep.subr.bf16.mxu0 0
    %430 = vmatpush1.bf16.msra.mxu0 0
    %431 = vmatprep.subr.bf16.mxu0 0
    %432 = vmatpush1.bf16.msra.mxu0 0
    %433 = vmatprep.subr.bf16.mxu0 0
    %434 = vmatpush1.bf16.msra.mxu0 0
    %435 = vmatprep.subr.bf16.mxu0 0
    %436 = vmatpush1.bf16.msra.mxu0 0
    %437 = vmatprep.subr.bf16.mxu0 0
    %438 = vmatpush1.bf16.msra.mxu0 0
    %439 = vmatprep.mubr.bf16.mxu0 0
    %440 = vmatmul.mubr.bf16.gmra.mrb[0].mxu0 %v405
    %v441 = vpop.f32.mrb[0].mxu0
    %v442 = vadd.f32 %v399, %v441
    %v443 = vpop.f32.mrb[0].mxu0
    %v444 = vpop.f32.mrb[0].mxu0
    %v445 = vpop.f32.mrb[0].mxu0
    %446 = vdwg.mxu0
    %v447 = vmul.f32 %v268, %v442
    %v448 = vld [vmem:[%s1] sm:$0x1]
    %v450 = vlaneseq
    %v451 = vshrl.u32 %v450, 7
    %v452 = vsub.s32 0, %v451
    %v453 = vrot.slane %v448, %v452
    %v455 = vmul.f32 %v447, %v453
    %v456 = vld [vmem:[%s2] sm:$0x1]
    %v458 = vlaneseq
    %v459 = vshrl.u32 %v458, 7
    %v460 = vsub.s32 0, %v459
    %v461 = vrot.slane %v456, %v460
    %v463 = vadd.f32 %v455, %v461
    %464 = vst [vmem:[#allocation2] sm:$0xf] %v463
    // Predicated region
    $region22: #{tpu_custom_call.1} parent=1 // pred_check
      _
    $region23: #{tpu_custom_call.1} parent=1 // pred_check_branch
      %466 = sbr.rel (0) target = $region25
    $region24: #{tpu_custom_call.1} parent=1 // pred_region
      %s468 = ssub.s32 64, 64
      %469 = vsyncadd [#allocation3], %s468
      %s471 = sshll.u32 [#allocation2], 4
      %s472 = int_to_ptr.vmem [resolvable:$true] %s471
      %474 = dma.vmem_to_hbm [thread:$0]  %s472, 64, %s5, [#allocation3]
    $region25: #{tpu_custom_call.1} parent=1 // pred_fallthru
      _
    // Predicated region
    $region26: #{tpu_custom_call.1} parent=1 // pred_check
      _
    $region27: #{tpu_custom_call.1} parent=1 // pred_check_branch
      %476 = sbr.rel (0) target = $region29
    $region28: #{tpu_custom_call.1} parent=1 // pred_region
      %477 = dma.done [#allocation3], 64
    $region29: #{tpu_custom_call.1} parent=1 // pred_fallthru
      _
    %478 = vsyncpa [#allocation3], 1

</llo_original>
